<compile_context>
chip_gen: v7x
topology: tpu7x:2x2x1
jax: 0.10.0
libtpu: 0.0.40
codegen_flags: <defaults>
</compile_context>

<pallas_src>
from functools import partial

import jax
import jax.numpy as jnp
from jax import lax
from jax.experimental import pallas as pl
from jax.experimental.pallas import tpu as pltpu


LN_EPS = 1e-5
LANE = 128


def _round_up(x, m):
    return (x + m - 1) // m * m


def _gelu_tanh(x):
    # tanh-approximation GELU (EUP-friendly)
    c = 0.7978845608028654  # sqrt(2/pi)
    return 0.5 * x * (1.0 + jnp.tanh(c * (x + 0.044715 * x * x * x)))


def _block_body(x, r, ln_w, ln_b, w1, b1, w2, b2, out_ref, res_out_ref, *, d_real):
    """x, r: (TB, Dp) fp32.  r may be None (first block)."""
    resid = x if r is None else x + r                      # fp32 residual
    d_pad = resid.shape[-1]

    # ---- LayerNorm over the (possibly padded) channel dim ----
    if d_real != d_pad:
        lane = lax.broadcasted_iota(jnp.int32, (1, d_pad), 1)
        mask = (lane < d_real).astype(jnp.float32)
        inv_d = 1.0 / float(d_real)
        mean = jnp.sum(resid, axis=-1, keepdims=True) * inv_d
        cent = (resid - mean) * mask
        var = jnp.sum(cent * cent, axis=-1, keepdims=True) * inv_d
    else:
        mean = jnp.mean(resid, axis=-1, keepdims=True)
        cent = resid - mean
        var = jnp.mean(cent * cent, axis=-1, keepdims=True)
    normed = cent * lax.rsqrt(var + LN_EPS)
    normed = normed * ln_w + ln_b                          # (TB, Dp) fp32

    # ---- Mixer MLP: bf16 operands on the MXU, fp32 accumulation ----
    h = jnp.dot(normed.astype(jnp.bfloat16), w1,
                preferred_element_type=jnp.float32) + b1
    h = _gelu_tanh(h)
    y = jnp.dot(h.astype(jnp.bfloat16), w2,
                preferred_element_type=jnp.float32) + b2

    out_ref[...] = y.astype(out_ref.dtype)
    res_out_ref[...] = resid                               # residual_in_fp32


def _kernel_with_res(hs_ref, res_ref, ln_w_ref, ln_b_ref, w1_ref, b1_ref,
                     w2_ref, b2_ref, out_ref, res_out_ref, *, d_real):
    _block_body(hs_ref[...].astype(jnp.float32),
                res_ref[...].astype(jnp.float32),
                ln_w_ref[...], ln_b_ref[...],
                w1_ref[...], b1_ref[...], w2_ref[...], b2_ref[...],
                out_ref, res_out_ref, d_real=d_real)


def _kernel_no_res(hs_ref, ln_w_ref, ln_b_ref, w1_ref, b1_ref,
                   w2_ref, b2_ref, out_ref, res_out_ref, *, d_real):
    _block_body(hs_ref[...].astype(jnp.float32), None,
                ln_w_ref[...], ln_b_ref[...],
                w1_ref[...], b1_ref[...], w2_ref[...], b2_ref[...],
                out_ref, res_out_ref, d_real=d_real)


def block_forward(hidden_states, residual, params, *, token_block=256):
    """hidden_states, residual: (B, L, D).  Pass residual=None for first block."""
    B, L, D = hidden_states.shape
    N = B * L
    H = params["w1"].shape[1]

    # Lane-dense padding of channel dims; token tile sized for the MXU.
    Dp = _round_up(D, LANE)
    Hp = _round_up(H, LANE)
    tb = min(token_block, _round_up(N, 32))
    Np = _round_up(N, tb)

    def pad2(a, rows, cols):
        return jnp.pad(a, ((0, rows - a.shape[0]), (0, cols - a.shape[1])))

    in_dtype = hidden_states.dtype
    itemsize = jnp.dtype(in_dtype).itemsize

    hs2 = pad2(hidden_states.reshape(N, D), Np, Dp)
    ln_w = pad2(params["ln_w"].reshape(1, D).astype(jnp.float32), 1, Dp)
    ln_b = pad2(params["ln_b"].reshape(1, D).astype(jnp.float32), 1, Dp)
    w1 = pad2(params["w1"].astype(jnp.bfloat16), Dp, Hp)     # bf16 weights
    b1 = pad2(params["b1"].reshape(1, H).astype(jnp.float32), 1, Hp)
    w2 = pad2(params["w2"].astype(jnp.bfloat16), Hp, Dp)
    b2 = pad2(params["b2"].reshape(1, D).astype(jnp.float32), 1, Dp)

    grid = (Np // tb,)
    row_spec = pl.BlockSpec((tb, Dp), lambda i: (i, 0))
    full = lambda shape: pl.BlockSpec(shape, lambda i: (0, 0))
    weight_specs = [
        full((1, Dp)),   # ln weight
        full((1, Dp)),   # ln bias
        full((Dp, Hp)),  # fc1 weight (bf16)
        full((1, Hp)),   # fc1 bias
        full((Hp, Dp)),  # fc2 weight (bf16)
        full((1, Dp)),   # fc2 bias
    ]

    if residual is None:
        # First block: no residual read at all (skip the zero-array DMA).
        kernel = partial(_kernel_no_res, d_real=D)
        in_specs = [row_spec] + weight_specs
        args = (hs2, ln_w, ln_b, w1, b1, w2, b2)
        read_bytes = Np * Dp * itemsize
    else:
        res2 = pad2(residual.reshape(N, D), Np, Dp)
        kernel = partial(_kernel_with_res, d_real=D)
        in_specs = [row_spec, row_spec] + weight_specs
        args = (hs2, res2, ln_w, ln_b, w1, b1, w2, b2)
        read_bytes = Np * Dp * (itemsize + jnp.dtype(res2.dtype).itemsize)

    # VMEM budget: bf16 weights + double-buffered row tiles + hidden activation.
    weight_bytes = 2 * Dp * Hp * 2
    tile_bytes = tb * Dp * (itemsize + 4 + itemsize + 4)
    hidden_bytes = tb * Hp * 4
    est = 2 * weight_bytes + 2 * tile_bytes + 2 * hidden_bytes
    vmem_limit = int(min(max(32 * 2**20, int(est * 1.3)), 56 * 2**20))

    cost = pl.CostEstimate(
        flops=4 * Np * Dp * Hp,                 # two matmuls
        transcendentals=Np * Hp,                # tanh in GELU
        bytes_accessed=read_bytes + Np * Dp * (itemsize + 4) + weight_bytes,
    )

    out, res_out = pl.pallas_call(
        kernel,
        out_shape=(
            jax.ShapeDtypeStruct((Np, Dp), in_dtype),
            jax.ShapeDtypeStruct((Np, Dp), jnp.float32),   # residual_in_fp32
        ),
        grid_spec=pltpu.PrefetchScalarGridSpec(
            num_scalar_prefetch=0,
            grid=grid,
            in_specs=in_specs,
            out_specs=[row_spec, row_spec],
        ),
        compiler_params=pltpu.CompilerParams(
            dimension_semantics=("parallel",),
            vmem_limit_bytes=vmem_limit),
        cost_estimate=cost,
    )(*args)

    out = out[:N, :D].reshape(B, L, D)
    res_out = res_out[:N, :D].reshape(B, L, D)
    return out, res_out


def block_reference(hidden_states, residual, params):
    """Pure-JAX fp32 reference for correctness checking."""
    resid = hidden_states if residual is None else residual + hidden_states
    resid = resid.astype(jnp.float32)
    mean = jnp.mean(resid, axis=-1, keepdims=True)
    var = jnp.mean((resid - mean) ** 2, axis=-1, keepdims=True)
    x = (resid - mean) * lax.rsqrt(var + LN_EPS)
    x = x * params["ln_w"] + params["ln_b"]
    h = _gelu_tanh(x @ params["w1"] + params["b1"])
    y = h @ params["w2"] + params["b2"]
    return y.astype(hidden_states.dtype), resid


def init_params(key, dim, hidden):
    ks = jax.random.split(key, 6)
    return {
        "ln_w": 1.0 + 0.1 * jax.random.normal(ks[0], (dim,), jnp.float32),
        "ln_b": 0.05 * jax.random.normal(ks[1], (dim,), jnp.float32),
        "w1": jax.random.normal(ks[2], (dim, hidden), jnp.float32) * 0.05,
        "b1": jax.random.normal(ks[3], (hidden,), jnp.float32) * 0.01,
        "w2": jax.random.normal(ks[4], (hidden, dim), jnp.float32) * 0.05,
        "b2": jax.random.normal(ks[5], (dim,), jnp.float32) * 0.01,
    }


def _check(out, res, ref_out, ref_res, tag):
    assert jnp.allclose(out, ref_out, atol=3e-2, rtol=3e-2), tag + " out mismatch"
    assert jnp.allclose(res, ref_res, atol=1e-5, rtol=1e-5), tag + " res mismatch"


if __name__ == "__main__":
    key = jax.random.PRNGKey(0)

    # ---- Case 1: lane-aligned dims, residual provided ----
    B, L, D = 2, 8, 128
    H = 4 * D
    k_h, k_r, k_p, k2 = jax.random.split(key, 4)
    hidden_states = jax.random.normal(k_h, (B, L, D), jnp.float32)
    residual = jax.random.normal(k_r, (B, L, D), jnp.float32)
    params = init_params(k_p, D, H)

    out, res = block_forward(hidden_states, residual, params)
    out = jax.block_until_ready(out)
    res = jax.block_until_ready(res)
    ref_out, ref_res = block_reference(hidden_states, residual, params)
    _check(out, res, ref_out, ref_res, "case1")

    # ---- Case 2: first block (residual is None) ----
    out0, res0 = block_forward(hidden_states, None, params)
    out0 = jax.block_until_ready(out0)
    ref_out0, ref_res0 = block_reference(hidden_states, None, params)
    _check(out0, res0, ref_out0, ref_res0, "case2")

    # ---- Case 3: unaligned dims (exercise D/H/token padding + masked LN) ----
    B2, L2, D2 = 2, 5, 96
    H2 = 4 * D2
    k_h2, k_r2, k_p2 = jax.random.split(k2, 3)
    hs2 = jax.random.normal(k_h2, (B2, L2, D2), jnp.float32)
    rs2 = jax.random.normal(k_r2, (B2, L2, D2), jnp.float32)
    params2 = init_params(k_p2, D2, H2)

    out2, res2 = block_forward(hs2, rs2, params2)
    out2 = jax.block_until_ready(out2)
    res2 = jax.block_until_ready(res2)
    ref_out2, ref_res2 = block_reference(hs2, rs2, params2)
    _check(out2, res2, ref_out2, ref_res2, "case3")

    print("KERNEL_OK")
</pallas_src>

<mosaic_0001>
module attributes {stable_mosaic.version = 11 : i64} {
  func.func @_kernel_with_res(%arg0: i32, %arg1: memref<32x128xf32, #tpu.memory_space<vmem>>, %arg2: memref<32x128xf32, #tpu.memory_space<vmem>>, %arg3: memref<1x128xf32, #tpu.memory_space<vmem>>, %arg4: memref<1x128xf32, #tpu.memory_space<vmem>>, %arg5: memref<128x512xbf16, #tpu.memory_space<vmem>>, %arg6: memref<1x512xf32, #tpu.memory_space<vmem>>, %arg7: memref<512x128xbf16, #tpu.memory_space<vmem>>, %arg8: memref<1x128xf32, #tpu.memory_space<vmem>>, %arg9: memref<32x128xf32, #tpu.memory_space<vmem>>, %arg10: memref<32x128xf32, #tpu.memory_space<vmem>>) attributes {dimension_semantics = [#tpu.dimension_semantics<parallel>], iteration_bounds = array<i64: 1>, scalar_prefetch = 0 : i64, scratch_operands = 0 : i64, tpu.core_type = #tpu.core_type<tc>, window_params = [{transform_indices = @transform_0, window_bounds = array<i64: 32, 128>}, {transform_indices = @transform_1, window_bounds = array<i64: 32, 128>}, {pipeline_mode = #tpu.pipeline_mode<synchronous>, transform_indices = @transform_2, window_bounds = array<i64: 1, 128>}, {pipeline_mode = #tpu.pipeline_mode<synchronous>, transform_indices = @transform_3, window_bounds = array<i64: 1, 128>}, {pipeline_mode = #tpu.pipeline_mode<synchronous>, transform_indices = @transform_4, window_bounds = array<i64: 128, 512>}, {pipeline_mode = #tpu.pipeline_mode<synchronous>, transform_indices = @transform_5, window_bounds = array<i64: 1, 512>}, {pipeline_mode = #tpu.pipeline_mode<synchronous>, transform_indices = @transform_6, window_bounds = array<i64: 512, 128>}, {pipeline_mode = #tpu.pipeline_mode<synchronous>, transform_indices = @transform_7, window_bounds = array<i64: 1, 128>}, {transform_indices = @transform_8, window_bounds = array<i64: 32, 128>}, {transform_indices = @transform_9, window_bounds = array<i64: 32, 128>}]} {
    %c0 = arith.constant 0 : index
    %c0_0 = arith.constant 0 : index
    %0 = vector.load %arg1[%c0, %c0_0] : memref<32x128xf32, #tpu.memory_space<vmem>>, vector<32x128xf32>
    %c0_1 = arith.constant 0 : index
    %c0_2 = arith.constant 0 : index
    %1 = vector.load %arg2[%c0_1, %c0_2] : memref<32x128xf32, #tpu.memory_space<vmem>>, vector<32x128xf32>
    %c0_3 = arith.constant 0 : index
    %c0_4 = arith.constant 0 : index
    %2 = vector.load %arg3[%c0_3, %c0_4] : memref<1x128xf32, #tpu.memory_space<vmem>>, vector<1x128xf32>
    %c0_5 = arith.constant 0 : index
    %c0_6 = arith.constant 0 : index
    %3 = vector.load %arg4[%c0_5, %c0_6] : memref<1x128xf32, #tpu.memory_space<vmem>>, vector<1x128xf32>
    %c0_7 = arith.constant 0 : index
    %c0_8 = arith.constant 0 : index
    %4 = vector.load %arg5[%c0_7, %c0_8] : memref<128x512xbf16, #tpu.memory_space<vmem>>, vector<128x512xbf16>
    %c0_9 = arith.constant 0 : index
    %c0_10 = arith.constant 0 : index
    %5 = vector.load %arg6[%c0_9, %c0_10] : memref<1x512xf32, #tpu.memory_space<vmem>>, vector<1x512xf32>
    %c0_11 = arith.constant 0 : index
    %c0_12 = arith.constant 0 : index
    %6 = vector.load %arg7[%c0_11, %c0_12] : memref<512x128xbf16, #tpu.memory_space<vmem>>, vector<512x128xbf16>
    %c0_13 = arith.constant 0 : index
    %c0_14 = arith.constant 0 : index
    %7 = vector.load %arg8[%c0_13, %c0_14] : memref<1x128xf32, #tpu.memory_space<vmem>>, vector<1x128xf32>
    %8 = arith.addf %0, %1 : vector<32x128xf32>
    %cst = arith.constant dense<0.000000e+00> : vector<32xf32>
    %9 = vector.multi_reduction <add>, %8, %cst [1] : vector<32x128xf32> to vector<32xf32>
    %10 = vector.shape_cast %9 : vector<32xf32> to vector<32x1xf32>
    %cst_15 = arith.constant 1.280000e+02 : f32
    %11 = vector.broadcast %cst_15 : f32 to vector<32x1xf32>
    %12 = arith.divf %10, %11 : vector<32x1xf32>
    %13 = vector.broadcast %12 : vector<32x1xf32> to vector<32x128xf32>
    %14 = arith.subf %8, %13 : vector<32x128xf32>
    %15 = arith.mulf %14, %14 : vector<32x128xf32>
    %cst_16 = arith.constant dense<0.000000e+00> : vector<32xf32>
    %16 = vector.multi_reduction <add>, %15, %cst_16 [1] : vector<32x128xf32> to vector<32xf32>
    %17 = vector.shape_cast %16 : vector<32xf32> to vector<32x1xf32>
    %cst_17 = arith.constant 1.280000e+02 : f32
    %18 = vector.broadcast %cst_17 : f32 to vector<32x1xf32>
    %19 = arith.divf %17, %18 : vector<32x1xf32>
    %cst_18 = arith.constant 9.99999974E-6 : f32
    %20 = vector.broadcast %cst_18 : f32 to vector<32x1xf32>
    %21 = arith.addf %19, %20 : vector<32x1xf32>
    %22 = math.rsqrt %21 : vector<32x1xf32>
    %23 = vector.broadcast %22 : vector<32x1xf32> to vector<32x128xf32>
    %24 = arith.mulf %14, %23 : vector<32x128xf32>
    %25 = vector.broadcast %2 : vector<1x128xf32> to vector<32x128xf32>
    %26 = arith.mulf %24, %25 : vector<32x128xf32>
    %27 = vector.broadcast %3 : vector<1x128xf32> to vector<32x128xf32>
    %28 = arith.addf %26, %27 : vector<32x128xf32>
    %29 = arith.truncf %28 : vector<32x128xf32> to vector<32x128xbf16>
    %cst_19 = arith.constant dense<0.000000e+00> : vector<32x512xf32>
    %30 = tpu.matmul %29, %4, %cst_19 {dimension_numbers = #tpu.dot_dimension_numbers<[1], [0], [0], [1], [0, 0, 1, 1], [], []>} : vector<32x128xbf16>, vector<128x512xbf16>, vector<32x512xf32> -> vector<32x512xf32>
    %31 = vector.broadcast %5 : vector<1x512xf32> to vector<32x512xf32>
    %32 = arith.addf %30, %31 : vector<32x512xf32>
    %cst_20 = arith.constant 5.000000e-01 : f32
    %33 = vector.broadcast %cst_20 : f32 to vector<32x512xf32>
    %34 = arith.mulf %33, %32 : vector<32x512xf32>
    %cst_21 = arith.constant 4.471500e-02 : f32
    %35 = vector.broadcast %cst_21 : f32 to vector<32x512xf32>
    %36 = arith.mulf %35, %32 : vector<32x512xf32>
    %37 = arith.mulf %36, %32 : vector<32x512xf32>
    %38 = arith.mulf %37, %32 : vector<32x512xf32>
    %39 = arith.addf %32, %38 : vector<32x512xf32>
    %cst_22 = arith.constant 0.797884583 : f32
    %40 = vector.broadcast %cst_22 : f32 to vector<32x512xf32>
    %41 = arith.mulf %40, %39 : vector<32x512xf32>
    %42 = math.tanh %41 : vector<32x512xf32>
    %cst_23 = arith.constant 1.000000e+00 : f32
    %43 = vector.broadcast %cst_23 : f32 to vector<32x512xf32>
    %44 = arith.addf %43, %42 : vector<32x512xf32>
    %45 = arith.mulf %34, %44 : vector<32x512xf32>
    %46 = arith.truncf %45 : vector<32x512xf32> to vector<32x512xbf16>
    %cst_24 = arith.constant dense<0.000000e+00> : vector<32x128xf32>
    %47 = tpu.matmul %46, %6, %cst_24 {dimension_numbers = #tpu.dot_dimension_numbers<[1], [0], [0], [1], [0, 0, 1, 1], [], []>} : vector<32x512xbf16>, vector<512x128xbf16>, vector<32x128xf32> -> vector<32x128xf32>
    %48 = vector.broadcast %7 : vector<1x128xf32> to vector<32x128xf32>
    %49 = arith.addf %47, %48 : vector<32x128xf32>
    %c0_25 = arith.constant 0 : index
    %c0_26 = arith.constant 0 : index
    %50 = vector.load %arg9[%c0_25, %c0_26] : memref<32x128xf32, #tpu.memory_space<vmem>>, vector<32x128xf32>
    tpu.vector_store %arg9[%c0_25, %c0_26], %49 {strides = array<i32>} : memref<32x128xf32, #tpu.memory_space<vmem>>, vector<32x128xf32>,
    %c0_27 = arith.constant 0 : index
    %c0_28 = arith.constant 0 : index
    %51 = vector.load %arg10[%c0_27, %c0_28] : memref<32x128xf32, #tpu.memory_space<vmem>>, vector<32x128xf32>
    tpu.vector_store %arg10[%c0_27, %c0_28], %8 {strides = array<i32>} : memref<32x128xf32, #tpu.memory_space<vmem>>, vector<32x128xf32>,
    return
  }
  func.func @transform_0(%arg0: i32) -> (i32, i32) {
    %c0_i32 = arith.constant 0 : i32
    %c0_i32_0 = arith.constant 0 : i32
    return %arg0, %c0_i32 : i32, i32
  }
  func.func @transform_1(%arg0: i32) -> (i32, i32) {
    %c0_i32 = arith.constant 0 : i32
    %c0_i32_0 = arith.constant 0 : i32
    return %arg0, %c0_i32 : i32, i32
  }
  func.func @transform_2(%arg0: i32) -> (i32, i32) {
    %c0_i32 = arith.constant 0 : i32
    %c0_i32_0 = arith.constant 0 : i32
    %c0_i32_1 = arith.constant 0 : i32
    return %c0_i32, %c0_i32_0 : i32, i32
  }
  func.func @transform_3(%arg0: i32) -> (i32, i32) {
    %c0_i32 = arith.constant 0 : i32
    %c0_i32_0 = arith.constant 0 : i32
    %c0_i32_1 = arith.constant 0 : i32
    return %c0_i32, %c0_i32_0 : i32, i32
  }
  func.func @transform_4(%arg0: i32) -> (i32, i32) {
    %c0_i32 = arith.constant 0 : i32
    %c0_i32_0 = arith.constant 0 : i32
    %c0_i32_1 = arith.constant 0 : i32
    return %c0_i32, %c0_i32_0 : i32, i32
  }
  func.func @transform_5(%arg0: i32) -> (i32, i32) {
    %c0_i32 = arith.constant 0 : i32
    %c0_i32_0 = arith.constant 0 : i32
    %c0_i32_1 = arith.constant 0 : i32
    return %c0_i32, %c0_i32_0 : i32, i32
  }
  func.func @transform_6(%arg0: i32) -> (i32, i32) {
    %c0_i32 = arith.constant 0 : i32
    %c0_i32_0 = arith.constant 0 : i32
    %c0_i32_1 = arith.constant 0 : i32
    return %c0_i32, %c0_i32_0 : i32, i32
  }
  func.func @transform_7(%arg0: i32) -> (i32, i32) {
    %c0_i32 = arith.constant 0 : i32
    %c0_i32_0 = arith.constant 0 : i32
    %c0_i32_1 = arith.constant 0 : i32
    return %c0_i32, %c0_i32_0 : i32, i32
  }
  func.func @transform_8(%arg0: i32) -> (i32, i32) {
    %c0_i32 = arith.constant 0 : i32
    %c0_i32_0 = arith.constant 0 : i32
    return %arg0, %c0_i32 : i32, i32
  }
  func.func @transform_9(%arg0: i32) -> (i32, i32) {
    %c0_i32 = arith.constant 0 : i32
    %c0_i32_0 = arith.constant 0 : i32
    return %arg0, %c0_i32 : i32, i32
  }
}

</mosaic_0001>

<llo_original>
// kernel: tpu_custom_call.1
$region0: #{tpu_custom_call.1}
  #allocation0 [shape = 'u32[]', space=smem, size = 0x4, offset = 0x4, fixed_abs, tag = 'smem constant byte address 0x4 - core index']
  #allocation1 [shape = 'u32[144,128]{1,0:T(1,128)}', space=vmem, size = 0x12000, scoped, tag = 'internal scratch']
  %s0 = inlined_call_operand.hbm [shape: f32[32,128], index: 0, kind: input, shape index: {}]
  %s1 = inlined_call_operand.hbm [shape: f32[32,128], index: 1, kind: input, shape index: {}]
  %s2 = inlined_call_operand.vmem [shape: f32[1,128], index: 2, kind: input, shape index: {}]
  %s3 = inlined_call_operand.vmem [shape: f32[1,128], index: 3, kind: input, shape index: {}]
  %s4 = inlined_call_operand.hbm [shape: bf16[128,512], index: 4, kind: input, shape index: {}]
  %s5 = inlined_call_operand.vmem [shape: f32[1,512], index: 5, kind: input, shape index: {}]
  %s6 = inlined_call_operand.hbm [shape: bf16[512,128], index: 6, kind: input, shape index: {}]
  %s7 = inlined_call_operand.vmem [shape: f32[1,128], index: 7, kind: input, shape index: {}]
  %s8 = inlined_call_operand.hbm [shape: f32[32,128], index: 8, kind: output, shape index: {0}]
  %s9 = inlined_call_operand.hbm [shape: f32[32,128], index: 9, kind: output, shape index: {1}]
  %10 = xla_tuple %s8, %s9
  %s11 = sld [smem:[#allocation0]]
  $region66: #{tpu_custom_call.1} parent=0
    _
  %s13 = ssub.s32 1, %s11
  %s14 = scalar_select 0, %s13, %s11
  $region1: #{tpu_custom_call.1} parent=0
    #allocation2 [shape = 'u8[16384]{0}', space=vmem, size = 0x4000, scoped, tag = 'input window, operand 0, single buffered']
    #allocation3 [shape = 's32[1]{0}', space=sflag, size = 0x4, scoped, tag = 'scoped memory for tpu_custom_call.1']
    #allocation4 [shape = 's32[1]{0}', space=sflag, size = 0x4, scoped, tag = 'scoped memory for tpu_custom_call.1']
    #allocation5 [shape = 'u8[16384]{0}', space=vmem, size = 0x4000, scoped, tag = 'input window, operand 1, single buffered']
    #allocation6 [shape = 's32[1]{0}', space=sflag, size = 0x4, scoped, tag = 'scoped memory for tpu_custom_call.1']
    #allocation7 [shape = 'u8[131072]{0}', space=vmem, size = 0x20000, scoped, tag = 'input window, operand 4, single buffered']
    #allocation8 [shape = 'u8[131072]{0}', space=vmem, size = 0x20000, scoped, tag = 'input window, operand 6, single buffered']
    #allocation9 [shape = 's32[1]{0}', space=sflag, size = 0x4, scoped, tag = 'scoped memory for tpu_custom_call.1']
    #allocation10 [shape = 'u8[16384]{0}', space=vmem, size = 0x4000, scoped, tag = 'output window, operand 0, single buffered']
    #allocation11 [shape = 'u8[16384]{0}', space=vmem, size = 0x4000, scoped, tag = 'output window, operand 1, single buffered']
    #allocation12 [shape = 's32[1]{0}', space=sflag, size = 0x4, scoped, tag = 'scoped memory for tpu_custom_call.1']
    %15 = vsyncpa [#allocation3], 0
    %16 = vsyncpa [#allocation6], 0
    %17 = vsyncpa [#allocation9], 0
    %18 = vsyncpa [#allocation4], 0
    %19 = vsyncpa [#allocation12], 0
    // Predicated region
    $region2: #{tpu_custom_call.1} parent=1 // pred_check
      _
    $region3: #{tpu_custom_call.1} parent=1 // pred_check_branch
      %21 = sbr.rel (0) target = $region5
    $region4: #{tpu_custom_call.1} parent=1 // pred_region
      %s23 = ssub.s32 512, 512
      %24 = vsyncadd [#allocation3], %s23
      %s25 = sshll.u32 [#allocation2], 4
      %s26 = int_to_ptr.vmem [resolvable:$true] %s25
      %31 = dma.hbm_to_vmem [thread:$0]  %s0, 512, %s26, [#allocation3], 128, 128, 8
    $region5: #{tpu_custom_call.1} parent=1 // pred_fallthru
      _
    // Predicated region
    $region6: #{tpu_custom_call.1} parent=1 // pred_check
      _
    $region7: #{tpu_custom_call.1} parent=1 // pred_check_branch
      %33 = sbr.rel (0) target = $region9
    $region8: #{tpu_custom_call.1} parent=1 // pred_region
      %s35 = ssub.s32 512, 512
      %36 = vsyncadd [#allocation6], %s35
      %s37 = sshll.u32 [#allocation5], 4
      %s38 = int_to_ptr.vmem [resolvable:$true] %s37
      %43 = dma.hbm_to_vmem [thread:$0]  %s1, 512, %s38, [#allocation6], 128, 128, 8
    $region9: #{tpu_custom_call.1} parent=1 // pred_fallthru
      _
    // Predicated region
    $region10: #{tpu_custom_call.1} parent=1 // pred_check
      _
    $region11: #{tpu_custom_call.1} parent=1 // pred_check_branch
      %45 = sbr.rel (0) target = $region13
    $region12: #{tpu_custom_call.1} parent=1 // pred_region
      _
    $region13: #{tpu_custom_call.1} parent=1 // pred_fallthru
      _
    // Predicated region
    $region14: #{tpu_custom_call.1} parent=1 // pred_check
      _
    $region15: #{tpu_custom_call.1} parent=1 // pred_check_branch
      %47 = sbr.rel (0) target = $region17
    $region16: #{tpu_custom_call.1} parent=1 // pred_region
      _
    $region17: #{tpu_custom_call.1} parent=1 // pred_fallthru
      _
    // Predicated region
    $region18: #{tpu_custom_call.1} parent=1 // pred_check
      _
    $region19: #{tpu_custom_call.1} parent=1 // pred_check_branch
      %49 = sbr.rel (0) target = $region21
    $region20: #{tpu_custom_call.1} parent=1 // pred_region
      %s51 = ssub.s32 4096, 4096
      %52 = vsyncadd [#allocation6], %s51
      %s53 = sshll.u32 [#allocation7], 4
      %s54 = int_to_ptr.vmem [resolvable:$true] %s53
      %59 = dma.hbm_to_vmem [thread:$0]  %s4, 4096, %s54, [#allocation6], 256, 256, 16
    $region21: #{tpu_custom_call.1} parent=1 // pred_fallthru
      _
    // Predicated region
    $region22: #{tpu_custom_call.1} parent=1 // pred_check
      _
    $region23: #{tpu_custom_call.1} parent=1 // pred_check_branch
      %61 = sbr.rel (0) target = $region25
    $region24: #{tpu_custom_call.1} parent=1 // pred_region
      _
    $region25: #{tpu_custom_call.1} parent=1 // pred_fallthru
      _
    // Predicated region
    $region26: #{tpu_custom_call.1} parent=1 // pred_check
      _
    $region27: #{tpu_custom_call.1} parent=1 // pred_check_branch
      %63 = sbr.rel (0) target = $region29
    $region28: #{tpu_custom_call.1} parent=1 // pred_region
      %s65 = ssub.s32 4096, 4096
      %66 = vsyncadd [#allocation9], %s65
      %s67 = sshll.u32 [#allocation8], 4
      %s68 = int_to_ptr.vmem [resolvable:$true] %s67
      %73 = dma.hbm_to_vmem [thread:$0]  %s6, 4096, %s68, [#allocation9], 64, 64, 4
    $region29: #{tpu_custom_call.1} parent=1 // pred_fallthru
      _
    // Predicated region
    $region30: #{tpu_custom_call.1} parent=1 // pred_check
      _
    $region31: #{tpu_custom_call.1} parent=1 // pred_check_branch
      %75 = sbr.rel (0) target = $region33
    $region32: #{tpu_custom_call.1} parent=1 // pred_region
      _
    $region33: #{tpu_custom_call.1} parent=1 // pred_fallthru
      _
    // Predicated region
    $region34: #{tpu_custom_call.1} parent=1 // pred_check
      _
    $region35: #{tpu_custom_call.1} parent=1 // pred_check_branch
      %77 = sbr.rel (0) target = $region37
    $region36: #{tpu_custom_call.1} parent=1 // pred_region
      %78 = dma.done [#allocation3], 512
    $region37: #{tpu_custom_call.1} parent=1 // pred_fallthru
      _
    // Predicated region
    $region38: #{tpu_custom_call.1} parent=1 // pred_check
      _
    $region39: #{tpu_custom_call.1} parent=1 // pred_check_branch
      %80 = sbr.rel (0) target = $region41
    $region40: #{tpu_custom_call.1} parent=1 // pred_region
      %81 = dma.done [#allocation6], 512
    $region41: #{tpu_custom_call.1} parent=1 // pred_fallthru
      _
    // Predicated region
    $region42: #{tpu_custom_call.1} parent=1 // pred_check
      _
    $region43: #{tpu_custom_call.1} parent=1 // pred_check_branch
      %83 = sbr.rel (0) target = $region45
    $region44: #{tpu_custom_call.1} parent=1 // pred_region
      %84 = dma.done [#allocation6], 4096
    $region45: #{tpu_custom_call.1} parent=1 // pred_fallthru
      _
    // Predicated region
    $region46: #{tpu_custom_call.1} parent=1 // pred_check
      _
    $region47: #{tpu_custom_call.1} parent=1 // pred_check_branch
      %86 = sbr.rel (0) target = $region49
    $region48: #{tpu_custom_call.1} parent=1 // pred_region
      %87 = dma.done [#allocation9], 4096
    $region49: #{tpu_custom_call.1} parent=1 // pred_fallthru
      _
    %v89 = vld [vmem:[#allocation2] sm:$0xff]
    %v90 = vld [vmem:[#allocation2 + $0x8] sm:$0xff]
    %v91 = vld [vmem:[#allocation2 + $0x10] sm:$0xff]
    %v92 = vld [vmem:[#allocation2 + $0x18] sm:$0xff]
    %v93 = vld [vmem:[#allocation5] sm:$0xff]
    %v94 = vld [vmem:[#allocation5 + $0x8] sm:$0xff]
    %v95 = vld [vmem:[#allocation5 + $0x10] sm:$0xff]
    %v96 = vld [vmem:[#allocation5 + $0x18] sm:$0xff]
    %v97 = vld [vmem:[%s2] sm:$0x1]
    %v98 = vld [vmem:[%s3] sm:$0x1]
    %v99 = vld [vmem:[#allocation7] sm:$0xff]
    %v100 = vld [vmem:[#allocation7 + $0x8] sm:$0xff]
    %v101 = vld [vmem:[#allocation7 + $0x10] sm:$0xff]
    %v102 = vld [vmem:[#allocation7 + $0x18] sm:$0xff]
    %v103 = vld [vmem:[#allocation7 + $0x20] sm:$0xff]
    %v104 = vld [vmem:[#allocation7 + $0x28] sm:$0xff]
    %v105 = vld [vmem:[#allocation7 + $0x30] sm:$0xff]
    %v106 = vld [vmem:[#allocation7 + $0x38] sm:$0xff]
    %v107 = vld [vmem:[#allocation7 + $0x40] sm:$0xff]
    %v108 = vld [vmem:[#allocation7 + $0x48] sm:$0xff]
    %v109 = vld [vmem:[#allocation7 + $0x50] sm:$0xff]
    %v110 = vld [vmem:[#allocation7 + $0x58] sm:$0xff]
    %v111 = vld [vmem:[#allocation7 + $0x60] sm:$0xff]
    %v112 = vld [vmem:[#allocation7 + $0x68] sm:$0xff]
    %v113 = vld [vmem:[#allocation7 + $0x70] sm:$0xff]
    %v114 = vld [vmem:[#allocation7 + $0x78] sm:$0xff]
    %v115 = vld [vmem:[#allocation7 + $0x80] sm:$0xff]
    %v116 = vld [vmem:[#allocation7 + $0x88] sm:$0xff]
    %v117 = vld [vmem:[#allocation7 + $0x90] sm:$0xff]
    %v118 = vld [vmem:[#allocation7 + $0x98] sm:$0xff]
    %v119 = vld [vmem:[#allocation7 + $0xa0] sm:$0xff]
    %v120 = vld [vmem:[#allocation7 + $0xa8] sm:$0xff]
    %v121 = vld [vmem:[#allocation7 + $0xb0] sm:$0xff]
    %v122 = vld [vmem:[#allocation7 + $0xb8] sm:$0xff]
    %v123 = vld [vmem:[#allocation7 + $0xc0] sm:$0xff]
    %v124 = vld [vmem:[#allocation7 + $0xc8] sm:$0xff]
    %v125 = vld [vmem:[#allocation7 + $0xd0] sm:$0xff]
    %v126 = vld [vmem:[#allocation7 + $0xd8] sm:$0xff]
    %v127 = vld [vmem:[#allocation7 + $0xe0] sm:$0xff]
    %v128 = vld [vmem:[#allocation7 + $0xe8] sm:$0xff]
    %v129 = vld [vmem:[#allocation7 + $0xf0] sm:$0xff]
    %v130 = vld [vmem:[#allocation7 + $0xf8] sm:$0xff]
    %v131 = vld [vmem:[%s5] sm:$0xf]
    %v132 = vld [vmem:[#allocation8] sm:$0xf]
    %v133 = vld [vmem:[#allocation8 + $0x4] sm:$0xf]
    %v134 = vld [vmem:[#allocation8 + $0x8] sm:$0xf]
    %v135 = vld [vmem:[#allocation8 + $0xc] sm:$0xf]
    %v136 = vld [vmem:[#allocation8 + $0x10] sm:$0xf]
    %v137 = vld [vmem:[#allocation8 + $0x14] sm:$0xf]
    %v138 = vld [vmem:[#allocation8 + $0x18] sm:$0xf]
    %v139 = vld [vmem:[#allocation8 + $0x1c] sm:$0xf]
    %v140 = vld [vmem:[#allocation8 + $0x20] sm:$0xf]
    %v141 = vld [vmem:[#allocation8 + $0x24] sm:$0xf]
    %v142 = vld [vmem:[#allocation8 + $0x28] sm:$0xf]
    %v143 = vld [vmem:[#allocation8 + $0x2c] sm:$0xf]
    %v144 = vld [vmem:[#allocation8 + $0x30] sm:$0xf]
    %v145 = vld [vmem:[#allocation8 + $0x34] sm:$0xf]
    %v146 = vld [vmem:[#allocation8 + $0x38] sm:$0xf]
    %v147 = vld [vmem:[#allocation8 + $0x3c] sm:$0xf]
    %v148 = vld [vmem:[#allocation8 + $0x40] sm:$0xf]
    %v149 = vld [vmem:[#allocation8 + $0x44] sm:$0xf]
    %v150 = vld [vmem:[#allocation8 + $0x48] sm:$0xf]
    %v151 = vld [vmem:[#allocation8 + $0x4c] sm:$0xf]
    %v152 = vld [vmem:[#allocation8 + $0x50] sm:$0xf]
    %v153 = vld [vmem:[#allocation8 + $0x54] sm:$0xf]
    %v154 = vld [vmem:[#allocation8 + $0x58] sm:$0xf]
    %v155 = vld [vmem:[#allocation8 + $0x5c] sm:$0xf]
    %v156 = vld [vmem:[#allocation8 + $0x60] sm:$0xf]
    %v157 = vld [vmem:[#allocation8 + $0x64] sm:$0xf]
    %v158 = vld [vmem:[#allocation8 + $0x68] sm:$0xf]
    %v159 = vld [vmem:[#allocation8 + $0x6c] sm:$0xf]
    %v160 = vld [vmem:[#allocation8 + $0x70] sm:$0xf]
    %v161 = vld [vmem:[#allocation8 + $0x74] sm:$0xf]
    %v162 = vld [vmem:[#allocation8 + $0x78] sm:$0xf]
    %v163 = vld [vmem:[#allocation8 + $0x7c] sm:$0xf]
    %v164 = vld [vmem:[#allocation8 + $0x80] sm:$0xf]
    %v165 = vld [vmem:[#allocation8 + $0x84] sm:$0xf]
    %v166 = vld [vmem:[#allocation8 + $0x88] sm:$0xf]
    %v167 = vld [vmem:[#allocation8 + $0x8c] sm:$0xf]
    %v168 = vld [vmem:[#allocation8 + $0x90] sm:$0xf]
    %v169 = vld [vmem:[#allocation8 + $0x94] sm:$0xf]
    %v170 = vld [vmem:[#allocation8 + $0x98] sm:$0xf]
    %v171 = vld [vmem:[#allocation8 + $0x9c] sm:$0xf]
    %v172 = vld [vmem:[#allocation8 + $0xa0] sm:$0xf]
    %v173 = vld [vmem:[#allocation8 + $0xa4] sm:$0xf]
    %v174 = vld [vmem:[#allocation8 + $0xa8] sm:$0xf]
    %v175 = vld [vmem:[#allocation8 + $0xac] sm:$0xf]
    %v176 = vld [vmem:[#allocation8 + $0xb0] sm:$0xf]
    %v177 = vld [vmem:[#allocation8 + $0xb4] sm:$0xf]
    %v178 = vld [vmem:[#allocation8 + $0xb8] sm:$0xf]
    %v179 = vld [vmem:[#allocation8 + $0xbc] sm:$0xf]
    %v180 = vld [vmem:[#allocation8 + $0xc0] sm:$0xf]
    %v181 = vld [vmem:[#allocation8 + $0xc4] sm:$0xf]
    %v182 = vld [vmem:[#allocation8 + $0xc8] sm:$0xf]
    %v183 = vld [vmem:[#allocation8 + $0xcc] sm:$0xf]
    %v184 = vld [vmem:[#allocation8 + $0xd0] sm:$0xf]
    %v185 = vld [vmem:[#allocation8 + $0xd4] sm:$0xf]
    %v186 = vld [vmem:[#allocation8 + $0xd8] sm:$0xf]
    %v187 = vld [vmem:[#allocation8 + $0xdc] sm:$0xf]
    %v188 = vld [vmem:[#allocation8 + $0xe0] sm:$0xf]
    %v189 = vld [vmem:[#allocation8 + $0xe4] sm:$0xf]
    %v190 = vld [vmem:[#allocation8 + $0xe8] sm:$0xf]
    %v191 = vld [vmem:[#allocation8 + $0xec] sm:$0xf]
    %v192 = vld [vmem:[#allocation8 + $0xf0] sm:$0xf]
    %v193 = vld [vmem:[#allocation8 + $0xf4] sm:$0xf]
    %v194 = vld [vmem:[#allocation8 + $0xf8] sm:$0xf]
    %v195 = vld [vmem:[#allocation8 + $0xfc] sm:$0xf]
    %v196 = vld [vmem:[%s7] sm:$0x1]
    %v197 = vadd.f32 %v89, %v93
    %v198 = vadd.f32 %v90, %v94
    %v199 = vadd.f32 %v91, %v95
    %v200 = vadd.f32 %v92, %v96
    %201 = vadd.xlane.f32.xlu0 %v197
    %v202 = vpop.xlane.xlu0 %201
    %203 = vadd.xlane.f32.xlu0 %v198
    %v204 = vpop.xlane.xlu0 %203
    %205 = vadd.xlane.f32.xlu0 %v199
    %v206 = vpop.xlane.xlu0 %205
    %207 = vadd.xlane.f32.xlu0 %v200
    %v208 = vpop.xlane.xlu0 %207
    %v209 = vrcp.pop 128.0
    %v210 = vmul.f32 %v202, %v209
    %v211 = vmul.f32 %v204, %v209
    %v212 = vmul.f32 %v206, %v209
    %v213 = vmul.f32 %v208, %v209
    %v214 = vsub.f32 %v197, %v210
    %v215 = vsub.f32 %v198, %v211
    %v216 = vsub.f32 %v199, %v212
    %v217 = vsub.f32 %v200, %v213
    %v218 = vmul.f32 %v214, %v214
    %v219 = vmul.f32 %v215, %v215
    %v220 = vmul.f32 %v216, %v216
    %v221 = vmul.f32 %v217, %v217
    %222 = vadd.xlane.f32.xlu0 %v218
    %v223 = vpop.xlane.xlu0 %222
    %224 = vadd.xlane.f32.xlu0 %v219
    %v225 = vpop.xlane.xlu0 %224
    %226 = vadd.xlane.f32.xlu0 %v220
    %v227 = vpop.xlane.xlu0 %226
    %228 = vadd.xlane.f32.xlu0 %v221
    %v229 = vpop.xlane.xlu0 %228
    %v230 = vmul.f32 %v223, %v209
    %v231 = vmul.f32 %v225, %v209
    %v232 = vmul.f32 %v227, %v209
    %v233 = vmul.f32 %v229, %v209
    %v234 = vadd.f32 %v230, 1e-05
    %v235 = vadd.f32 %v231, 1e-05
    %v236 = vadd.f32 %v232, 1e-05
    %v237 = vadd.f32 %v233, 1e-05
    %v238 = vrsqrt.pop %v234
    %v239 = vrsqrt.pop %v235
    %v240 = vrsqrt.pop %v236
    %v241 = vrsqrt.pop %v237
    %v242 = vmul.f32 %v214, %v238
    %v243 = vmul.f32 %v215, %v239
    %v244 = vmul.f32 %v216, %v240
    %v245 = vmul.f32 %v217, %v241
    %v247 = vlaneseq
    %v248 = vshrl.u32 %v247, 7
    %v249 = vsub.s32 0, %v248
    %v250 = vrot.slane %v97, %v249
    %v252 = vmul.f32 %v242, %v250
    %v253 = vmul.f32 %v243, %v250
    %v254 = vmul.f32 %v244, %v250
    %v255 = vmul.f32 %v245, %v250
    %v257 = vlaneseq
    %v258 = vshrl.u32 %v257, 7
    %v259 = vsub.s32 0, %v258
    %v260 = vrot.slane %v98, %v259
    %v262 = vadd.f32 %v252, %v260
    %v263 = vadd.f32 %v253, %v260
    %v264 = vadd.f32 %v254, %v260
    %v265 = vadd.f32 %v255, %v260
    %v266 = vpack.c.bf16 %v263, %v262
    %v267 = vpack.c.bf16 %v265, %v264
    %v269 = vlaneseq
    %v270 = vshrl.u32 %v269, 7
    %v271 = vsub.s32 0, %v270
    %v272 = vrot.slane %v131, %v271
    %v273 = vlaneseq
    %v274 = vshrl.u32 %v273, 7
    %v275 = vsub.s32 1, %v274
    %v276 = vrot.slane %v131, %v275
    %v277 = vlaneseq
    %v278 = vshrl.u32 %v277, 7
    %v279 = vsub.s32 2, %v278
    %v280 = vrot.slane %v131, %v279
    %v281 = vlaneseq
    %v282 = vshrl.u32 %v281, 7
    %v283 = vsub.s32 3, %v282
    %v284 = vrot.slane %v131, %v283
    %v321 = vunpack.c.l.b16 %v99
    %v322 = vunpack.c.h.b16 %v99
    %v323 = vunpack.c.l.b16 %v100
    %v324 = vunpack.c.h.b16 %v100
    %v325 = vunpack.c.l.b16 %v101
    %v326 = vunpack.c.h.b16 %v101
    %v327 = vunpack.c.l.b16 %v102
    %v328 = vunpack.c.h.b16 %v102
    %v329 = vunpack.c.l.b16 %v103
    %v330 = vunpack.c.h.b16 %v103
    %v331 = vunpack.c.l.b16 %v104
    %v332 = vunpack.c.h.b16 %v104
    %v333 = vunpack.c.l.b16 %v105
    %v334 = vunpack.c.h.b16 %v105
    %v335 = vunpack.c.l.b16 %v106
    %v336 = vunpack.c.h.b16 %v106
    %v337 = vunpack.c.l.b16 %v107
    %v338 = vunpack.c.h.b16 %v107
    %v339 = vunpack.c.l.b16 %v108
    %v340 = vunpack.c.h.b16 %v108
    %v341 = vunpack.c.l.b16 %v109
    %v342 = vunpack.c.h.b16 %v109
    %v343 = vunpack.c.l.b16 %v110
    %v344 = vunpack.c.h.b16 %v110
    %v345 = vunpack.c.l.b16 %v111
    %v346 = vunpack.c.h.b16 %v111
    %v347 = vunpack.c.l.b16 %v112
    %v348 = vunpack.c.h.b16 %v112
    %v349 = vunpack.c.l.b16 %v113
    %v350 = vunpack.c.h.b16 %v113
    %v351 = vunpack.c.l.b16 %v114
    %v352 = vunpack.c.h.b16 %v114
    %v353 = vunpack.c.l.b16 %v115
    %v354 = vunpack.c.h.b16 %v115
    %v355 = vunpack.c.l.b16 %v116
    %v356 = vunpack.c.h.b16 %v116
    %v357 = vunpack.c.l.b16 %v117
    %v358 = vunpack.c.h.b16 %v117
    %v359 = vunpack.c.l.b16 %v118
    %v360 = vunpack.c.h.b16 %v118
    %v361 = vunpack.c.l.b16 %v119
    %v362 = vunpack.c.h.b16 %v119
    %v363 = vunpack.c.l.b16 %v120
    %v364 = vunpack.c.h.b16 %v120
    %v365 = vunpack.c.l.b16 %v121
    %v366 = vunpack.c.h.b16 %v121
    %v367 = vunpack.c.l.b16 %v122
    %v368 = vunpack.c.h.b16 %v122
    %v369 = vunpack.c.l.b16 %v123
    %v370 = vunpack.c.h.b16 %v123
    %v371 = vunpack.c.l.b16 %v124
    %v372 = vunpack.c.h.b16 %v124
    %v373 = vunpack.c.l.b16 %v125
    %v374 = vunpack.c.h.b16 %v125
    %v375 = vunpack.c.l.b16 %v126
    %v376 = vunpack.c.h.b16 %v126
    %v377 = vunpack.c.l.b16 %v127
    %v378 = vunpack.c.h.b16 %v127
    %v379 = vunpack.c.l.b16 %v128
    %v380 = vunpack.c.h.b16 %v128
    %v381 = vunpack.c.l.b16 %v129
    %v382 = vunpack.c.h.b16 %v129
    %v383 = vunpack.c.l.b16 %v130
    %v384 = vunpack.c.h.b16 %v130
    %v385 = vpack.c.b16 %v325, %v321
    %v386 = vpack.c.b16 %v326, %v322
    %v387 = vpack.c.b16 %v327, %v323
    %v388 = vpack.c.b16 %v328, %v324
    %v389 = vpack.c.b16 %v333, %v329
    %v390 = vpack.c.b16 %v334, %v330
    %v391 = vpack.c.b16 %v335, %v331
    %v392 = vpack.c.b16 %v336, %v332
    %v393 = vpack.c.b16 %v341, %v337
    %v394 = vpack.c.b16 %v342, %v338
    %v395 = vpack.c.b16 %v343, %v339
    %v396 = vpack.c.b16 %v344, %v340
    %v397 = vpack.c.b16 %v349, %v345
    %v398 = vpack.c.b16 %v350, %v346
    %v399 = vpack.c.b16 %v351, %v347
    %v400 = vpack.c.b16 %v352, %v348
    %v401 = vpack.c.b16 %v357, %v353
    %v402 = vpack.c.b16 %v358, %v354
    %v403 = vpack.c.b16 %v359, %v355
    %v404 = vpack.c.b16 %v360, %v356
    %v405 = vpack.c.b16 %v365, %v361
    %v406 = vpack.c.b16 %v366, %v362
    %v407 = vpack.c.b16 %v367, %v363
    %v408 = vpack.c.b16 %v368, %v364
    %v409 = vpack.c.b16 %v373, %v369
    %v410 = vpack.c.b16 %v374, %v370
    %v411 = vpack.c.b16 %v375, %v371
    %v412 = vpack.c.b16 %v376, %v372
    %v413 = vpack.c.b16 %v381, %v377
    %v414 = vpack.c.b16 %v382, %v378
    %v415 = vpack.c.b16 %v383, %v379
    %v416 = vpack.c.b16 %v384, %v380
    %449 = vmatprep.subr.bf16.mxu0 %v386
    %450 = vmatpush1.bf16.msra.mxu0 %v385
    %451 = vmatprep.subr.bf16.mxu0 %v390
    %452 = vmatpush1.bf16.msra.mxu0 %v389
    %453 = vmatprep.subr.bf16.mxu0 %v394
    %454 = vmatpush1.bf16.msra.mxu0 %v393
    %455 = vmatprep.subr.bf16.mxu0 %v398
    %456 = vmatpush1.bf16.msra.mxu0 %v397
    %457 = vmatprep.subr.bf16.mxu0 %v402
    %458 = vmatpush1.bf16.msra.mxu0 %v401
    %459 = vmatprep.subr.bf16.mxu0 %v406
    %460 = vmatpush1.bf16.msra.mxu0 %v405
    %461 = vmatprep.subr.bf16.mxu0 %v410
    %462 = vmatpush1.bf16.msra.mxu0 %v409
    %463 = vmatprep.subr.bf16.mxu0 %v414
    %464 = vmatpush1.bf16.msra.mxu0 %v413
    %465 = vmatprep.subr.bf16.mxu0 0
    %466 = vmatpush1.bf16.msra.mxu0 0
    %467 = vmatprep.subr.bf16.mxu0 0
    %468 = vmatpush1.bf16.msra.mxu0 0
    %469 = vmatprep.subr.bf16.mxu0 0
    %470 = vmatpush1.bf16.msra.mxu0 0
    %471 = vmatprep.subr.bf16.mxu0 0
    %472 = vmatpush1.bf16.msra.mxu0 0
    %473 = vmatprep.subr.bf16.mxu0 0
    %474 = vmatpush1.bf16.msra.mxu0 0
    %475 = vmatprep.subr.bf16.mxu0 0
    %476 = vmatpush1.bf16.msra.mxu0 0
    %477 = vmatprep.subr.bf16.mxu0 0
    %478 = vmatpush1.bf16.msra.mxu0 0
    %479 = vmatprep.subr.bf16.mxu0 0
    %480 = vmatpush1.bf16.msra.mxu0 0
    %481 = vmatprep.mubr.bf16.mxu0 0
    %482 = vmatmul.mubr.bf16.gmra.mrb[0].mxu0 %v266
    %v483 = vpop.f32.mrb[0].mxu0
    %v484 = vadd.f32 %v272, %v483
    %v485 = vpop.f32.mrb[0].mxu0
    %v486 = vadd.f32 %v276, %v485
    %v487 = vpop.f32.mrb[0].mxu0
    %v488 = vadd.f32 %v272, %v487
    %v489 = vpop.f32.mrb[0].mxu0
    %v490 = vadd.f32 %v276, %v489
    %491 = vmatprep.mubr.bf16.mxu0 0
    %492 = vmatmul.mubr.bf16.gmra.mrb[0].mxu0 %v267
    %v493 = vpop.f32.mrb[0].mxu0
    %v494 = vadd.f32 %v272, %v493
    %v495 = vpop.f32.mrb[0].mxu0
    %v496 = vadd.f32 %v276, %v495
    %v497 = vpop.f32.mrb[0].mxu0
    %v498 = vadd.f32 %v272, %v497
    %v499 = vpop.f32.mrb[0].mxu0
    %v500 = vadd.f32 %v276, %v499
    %501 = vdwg.mxu0
    %502 = vmatprep.subr.bf16.mxu0 %v388
    %503 = vmatpush1.bf16.msra.mxu0 %v387
    %504 = vmatprep.subr.bf16.mxu0 %v392
    %505 = vmatpush1.bf16.msra.mxu0 %v391
    %506 = vmatprep.subr.bf16.mxu0 %v396
    %507 = vmatpush1.bf16.msra.mxu0 %v395
    %508 = vmatprep.subr.bf16.mxu0 %v400
    %509 = vmatpush1.bf16.msra.mxu0 %v399
    %510 = vmatprep.subr.bf16.mxu0 %v404
    %511 = vmatpush1.bf16.msra.mxu0 %v403
    %512 = vmatprep.subr.bf16.mxu0 %v408
    %513 = vmatpush1.bf16.msra.mxu0 %v407
    %514 = vmatprep.subr.bf16.mxu0 %v412
    %515 = vmatpush1.bf16.msra.mxu0 %v411
    %516 = vmatprep.subr.bf16.mxu0 %v416
    %517 = vmatpush1.bf16.msra.mxu0 %v415
    %518 = vmatprep.subr.bf16.mxu0 0
    %519 = vmatpush1.bf16.msra.mxu0 0
    %520 = vmatprep.subr.bf16.mxu0 0
    %521 = vmatpush1.bf16.msra.mxu0 0
    %522 = vmatprep.subr.bf16.mxu0 0
    %523 = vmatpush1.bf16.msra.mxu0 0
    %524 = vmatprep.subr.bf16.mxu0 0
    %525 = vmatpush1.bf16.msra.mxu0 0
    %526 = vmatprep.subr.bf16.mxu0 0
    %527 = vmatpush1.bf16.msra.mxu0 0
    %528 = vmatprep.subr.bf16.mxu0 0
    %529 = vmatpush1.bf16.msra.mxu0 0
    %530 = vmatprep.subr.bf16.mxu0 0
    %531 = vmatpush1.bf16.msra.mxu0 0
    %532 = vmatprep.subr.bf16.mxu0 0
    %533 = vmatpush1.bf16.msra.mxu0 0
    %534 = vmatprep.mubr.bf16.mxu0 0
    %535 = vmatmul.mubr.bf16.gmra.mrb[0].mxu0 %v266
    %v536 = vpop.f32.mrb[0].mxu0
    %v537 = vadd.f32 %v280, %v536
    %v538 = vpop.f32.mrb[0].mxu0
    %v539 = vadd.f32 %v284, %v538
    %v540 = vpop.f32.mrb[0].mxu0
    %v541 = vadd.f32 %v280, %v540
    %v542 = vpop.f32.mrb[0].mxu0
    %v543 = vadd.f32 %v284, %v542
    %544 = vmatprep.mubr.bf16.mxu0 0
    %545 = vmatmul.mubr.bf16.gmra.mrb[0].mxu0 %v267
    %v546 = vpop.f32.mrb[0].mxu0
    %v547 = vadd.f32 %v280, %v546
    %v548 = vpop.f32.mrb[0].mxu0
    %v549 = vadd.f32 %v284, %v548
    %v550 = vpop.f32.mrb[0].mxu0
    %v551 = vadd.f32 %v280, %v550
    %v552 = vpop.f32.mrb[0].mxu0
    %v553 = vadd.f32 %v284, %v552
    %554 = vdwg.mxu0
    %v555 = vmul.f32 %v484, 0.5
    %v556 = vmul.f32 %v486, 0.5
    %v557 = vmul.f32 %v537, 0.5
    %v558 = vmul.f32 %v539, 0.5
    %v559 = vmul.f32 %v488, 0.5
    %v560 = vmul.f32 %v490, 0.5
    %v561 = vmul.f32 %v541, 0.5
    %v562 = vmul.f32 %v543, 0.5
    %v563 = vmul.f32 %v494, 0.5
    %v564 = vmul.f32 %v496, 0.5
    %v565 = vmul.f32 %v547, 0.5
    %v566 = vmul.f32 %v549, 0.5
    %v567 = vmul.f32 %v498, 0.5
    %v568 = vmul.f32 %v500, 0.5
    %v569 = vmul.f32 %v551, 0.5
    %v570 = vmul.f32 %v553, 0.5
    %v571 = vmul.f32 %v484, 0.044715
    %v572 = vmul.f32 %v486, 0.044715
    %v573 = vmul.f32 %v537, 0.044715
    %v574 = vmul.f32 %v539, 0.044715
    %v575 = vmul.f32 %v488, 0.044715
    %v576 = vmul.f32 %v490, 0.044715
    %v577 = vmul.f32 %v541, 0.044715
    %v578 = vmul.f32 %v543, 0.044715
    %v579 = vmul.f32 %v494, 0.044715
    %v580 = vmul.f32 %v496, 0.044715
    %v581 = vmul.f32 %v547, 0.044715
    %v582 = vmul.f32 %v549, 0.044715
    %v583 = vmul.f32 %v498, 0.044715
    %v584 = vmul.f32 %v500, 0.044715
    %v585 = vmul.f32 %v551, 0.044715
    %v586 = vmul.f32 %v553, 0.044715
    %v587 = vmul.f32 %v571, %v484
    %v588 = vmul.f32 %v572, %v486
    %v589 = vmul.f32 %v573, %v537
    %v590 = vmul.f32 %v574, %v539
    %v591 = vmul.f32 %v575, %v488
    %v592 = vmul.f32 %v576, %v490
    %v593 = vmul.f32 %v577, %v541
    %v594 = vmul.f32 %v578, %v543
    %v595 = vmul.f32 %v579, %v494
    %v596 = vmul.f32 %v580, %v496
    %v597 = vmul.f32 %v581, %v547
    %v598 = vmul.f32 %v582, %v549
    %v599 = vmul.f32 %v583, %v498
    %v600 = vmul.f32 %v584, %v500
    %v601 = vmul.f32 %v585, %v551
    %v602 = vmul.f32 %v586, %v553
    %v603 = vmul.f32 %v587, %v484
    %v604 = vmul.f32 %v588, %v486
    %v605 = vmul.f32 %v589, %v537
    %v606 = vmul.f32 %v590, %v539
    %v607 = vmul.f32 %v591, %v488
    %v608 = vmul.f32 %v592, %v490
    %v609 = vmul.f32 %v593, %v541
    %v610 = vmul.f32 %v594, %v543
    %v611 = vmul.f32 %v595, %v494
    %v612 = vmul.f32 %v596, %v496
    %v613 = vmul.f32 %v597, %v547
    %v614 = vmul.f32 %v598, %v549
    %v615 = vmul.f32 %v599, %v498
    %v616 = vmul.f32 %v600, %v500
    %v617 = vmul.f32 %v601, %v551
    %v618 = vmul.f32 %v602, %v553
    %v619 = vadd.f32 %v484, %v603
    %v620 = vadd.f32 %v486, %v604
    %v621 = vadd.f32 %v537, %v605
    %v622 = vadd.f32 %v539, %v606
    %v623 = vadd.f32 %v488, %v607
    %v624 = vadd.f32 %v490, %v608
    %v625 = vadd.f32 %v541, %v609
    %v626 = vadd.f32 %v543, %v610
    %v627 = vadd.f32 %v494, %v611
    %v628 = vadd.f32 %v496, %v612
    %v629 = vadd.f32 %v547, %v613
    %v630 = vadd.f32 %v549, %v614
    %v631 = vadd.f32 %v498, %v615
    %v632 = vadd.f32 %v500, %v616
    %v633 = vadd.f32 %v551, %v617
    %v634 = vadd.f32 %v553, %v618
    %v635 = vmul.f32 %v619, 0.7978846
    %v636 = vmul.f32 %v620, 0.7978846
    %v637 = vmul.f32 %v621, 0.7978846
    %v638 = vmul.f32 %v622, 0.7978846
    %v639 = vmul.f32 %v623, 0.7978846
    %v640 = vmul.f32 %v624, 0.7978846
    %v641 = vmul.f32 %v625, 0.7978846
    %v642 = vmul.f32 %v626, 0.7978846
    %v643 = vmul.f32 %v627, 0.7978846
    %v644 = vmul.f32 %v628, 0.7978846
    %v645 = vmul.f32 %v629, 0.7978846
    %v646 = vmul.f32 %v630, 0.7978846
    %v647 = vmul.f32 %v631, 0.7978846
    %v648 = vmul.f32 %v632, 0.7978846
    %v649 = vmul.f32 %v633, 0.7978846
    %v650 = vmul.f32 %v634, 0.7978846
    %v651 = vtanh.pop %v635
    %v652 = vtanh.pop %v636
    %v653 = vtanh.pop %v637
    %v654 = vtanh.pop %v638
    %v655 = vtanh.pop %v639
    %v656 = vtanh.pop %v640
    %v657 = vtanh.pop %v641
    %v658 = vtanh.pop %v642
    %v659 = vtanh.pop %v643
    %v660 = vtanh.pop %v644
    %v661 = vtanh.pop %v645
    %v662 = vtanh.pop %v646
    %v663 = vtanh.pop %v647
    %v664 = vtanh.pop %v648
    %v665 = vtanh.pop %v649
    %v666 = vtanh.pop %v650
    %v667 = vadd.f32 %v651, 1.0
    %v668 = vadd.f32 %v652, 1.0
    %v669 = vadd.f32 %v653, 1.0
    %v670 = vadd.f32 %v654, 1.0
    %v671 = vadd.f32 %v655, 1.0
    %v672 = vadd.f32 %v656, 1.0
    %v673 = vadd.f32 %v657, 1.0
    %v674 = vadd.f32 %v658, 1.0
    %v675 = vadd.f32 %v659, 1.0
    %v676 = vadd.f32 %v660, 1.0
    %v677 = vadd.f32 %v661, 1.0
    %v678 = vadd.f32 %v662, 1.0
    %v679 = vadd.f32 %v663, 1.0
    %v680 = vadd.f32 %v664, 1.0
    %v681 = vadd.f32 %v665, 1.0
    %v682 = vadd.f32 %v666, 1.0
    %v683 = vmul.f32 %v555, %v667
    %v684 = vmul.f32 %v556, %v668
    %v685 = vmul.f32 %v557, %v669
    %v686 = vmul.f32 %v558, %v670
    %v687 = vmul.f32 %v559, %v671
    %v688 = vmul.f32 %v560, %v672
    %v689 = vmul.f32 %v561, %v673
    %v690 = vmul.f32 %v562, %v674
    %v691 = vmul.f32 %v563, %v675
    %v692 = vmul.f32 %v564, %v676
    %v693 = vmul.f32 %v565, %v677
    %v694 = vmul.f32 %v566, %v678
    %v695 = vmul.f32 %v567, %v679
    %v696 = vmul.f32 %v568, %v680
    %v697 = vmul.f32 %v569, %v681
    %v698 = vmul.f32 %v570, %v682
    %v699 = vpack.c.bf16 %v687, %v683
    %v700 = vpack.c.bf16 %v688, %v684
    %v701 = vpack.c.bf16 %v689, %v685
    %v702 = vpack.c.bf16 %v690, %v686
    %v703 = vpack.c.bf16 %v695, %v691
    %v704 = vpack.c.bf16 %v696, %v692
    %v705 = vpack.c.bf16 %v697, %v693
    %v706 = vpack.c.bf16 %v698, %v694
    %v708 = vlaneseq
    %v709 = vshrl.u32 %v708, 7
    %v710 = vsub.s32 0, %v709
    %v711 = vrot.slane %v196, %v710
    %v777 = vunpack.c.l.b16 %v132
    %v778 = vunpack.c.l.b16 %v133
    %v779 = vunpack.c.l.b16 %v134
    %v780 = vunpack.c.l.b16 %v135
    %v781 = vunpack.c.l.b16 %v136
    %v782 = vunpack.c.l.b16 %v137
    %v783 = vunpack.c.l.b16 %v138
    %v784 = vunpack.c.l.b16 %v139
    %v785 = vunpack.c.l.b16 %v140
    %v786 = vunpack.c.l.b16 %v141
    %v787 = vunpack.c.l.b16 %v142
    %v788 = vunpack.c.l.b16 %v143
    %v789 = vunpack.c.l.b16 %v144
    %v790 = vunpack.c.l.b16 %v145
    %v791 = vunpack.c.l.b16 %v146
    %v792 = vunpack.c.l.b16 %v147
    %v793 = vunpack.c.l.b16 %v148
    %v794 = vunpack.c.l.b16 %v149
    %v795 = vunpack.c.l.b16 %v150
    %v796 = vunpack.c.l.b16 %v151
    %v797 = vunpack.c.l.b16 %v152
    %v798 = vunpack.c.l.b16 %v153
    %v799 = vunpack.c.l.b16 %v154
    %v800 = vunpack.c.l.b16 %v155
    %v801 = vunpack.c.l.b16 %v156
    %v802 = vunpack.c.l.b16 %v157
    %v803 = vunpack.c.l.b16 %v158
    %v804 = vunpack.c.l.b16 %v159
    %v805 = vunpack.c.l.b16 %v160
    %v806 = vunpack.c.l.b16 %v161
    %v807 = vunpack.c.l.b16 %v162
    %v808 = vunpack.c.l.b16 %v163
    %v809 = vunpack.c.l.b16 %v164
    %v810 = vunpack.c.l.b16 %v165
    %v811 = vunpack.c.l.b16 %v166
    %v812 = vunpack.c.l.b16 %v167
    %v813 = vunpack.c.l.b16 %v168
    %v814 = vunpack.c.l.b16 %v169
    %v815 = vunpack.c.l.b16 %v170
    %v816 = vunpack.c.l.b16 %v171
    %v817 = vunpack.c.l.b16 %v172
    %v818 = vunpack.c.l.b16 %v173
    %v819 = vunpack.c.l.b16 %v174
    %v820 = vunpack.c.l.b16 %v175
    %v821 = vunpack.c.l.b16 %v176
    %v822 = vunpack.c.l.b16 %v177
    %v823 = vunpack.c.l.b16 %v178
    %v824 = vunpack.c.l.b16 %v179
    %v825 = vunpack.c.l.b16 %v180
    %v826 = vunpack.c.l.b16 %v181
    %v827 = vunpack.c.l.b16 %v182
    %v828 = vunpack.c.l.b16 %v183
    %v829 = vunpack.c.l.b16 %v184
    %v830 = vunpack.c.l.b16 %v185
    %v831 = vunpack.c.l.b16 %v186
    %v832 = vunpack.c.l.b16 %v187
    %v833 = vunpack.c.l.b16 %v188
    %v834 = vunpack.c.l.b16 %v189
    %v835 = vunpack.c.l.b16 %v190
    %v836 = vunpack.c.l.b16 %v191
    %v837 = vunpack.c.l.b16 %v192
    %v838 = vunpack.c.l.b16 %v193
    %v839 = vunpack.c.l.b16 %v194
    %v840 = vunpack.c.l.b16 %v195
    %v841 = vpack.c.b16 %v778, %v777
    %v842 = vpack.c.b16 %v780, %v779
    %v843 = vpack.c.b16 %v782, %v781
    %v844 = vpack.c.b16 %v784, %v783
    %v845 = vpack.c.b16 %v786, %v785
    %v846 = vpack.c.b16 %v788, %v787
    %v847 = vpack.c.b16 %v790, %v789
    %v848 = vpack.c.b16 %v792, %v791
    %v849 = vpack.c.b16 %v794, %v793
    %v850 = vpack.c.b16 %v796, %v795
    %v851 = vpack.c.b16 %v798, %v797
    %v852 = vpack.c.b16 %v800, %v799
    %v853 = vpack.c.b16 %v802, %v801
    %v854 = vpack.c.b16 %v804, %v803
    %v855 = vpack.c.b16 %v806, %v805
    %v856 = vpack.c.b16 %v808, %v807
    %v857 = vpack.c.b16 %v810, %v809
    %v858 = vpack.c.b16 %v812, %v811
    %v859 = vpack.c.b16 %v814, %v813
    %v860 = vpack.c.b16 %v816, %v815
    %v861 = vpack.c.b16 %v818, %v817
    %v862 = vpack.c.b16 %v820, %v819
    %v863 = vpack.c.b16 %v822, %v821
    %v864 = vpack.c.b16 %v824, %v823
    %v865 = vpack.c.b16 %v826, %v825
    %v866 = vpack.c.b16 %v828, %v827
    %v867 = vpack.c.b16 %v830, %v829
    %v868 = vpack.c.b16 %v832, %v831
    %v869 = vpack.c.b16 %v834, %v833
    %v870 = vpack.c.b16 %v836, %v835
    %v871 = vpack.c.b16 %v838, %v837
    %v872 = vpack.c.b16 %v840, %v839
    %905 = vmatprep.subr.bf16.mxu0 0
    %906 = vmatpush1.bf16.msra.mxu0 %v841
    %907 = vmatprep.subr.bf16.mxu0 0
    %908 = vmatpush1.bf16.msra.mxu0 %v842
    %909 = vmatprep.subr.bf16.mxu0 0
    %910 = vmatpush1.bf16.msra.mxu0 %v843
    %911 = vmatprep.subr.bf16.mxu0 0
    %912 = vmatpush1.bf16.msra.mxu0 %v844
    %913 = vmatprep.subr.bf16.mxu0 0
    %914 = vmatpush1.bf16.msra.mxu0 %v845
    %915 = vmatprep.subr.bf16.mxu0 0
    %916 = vmatpush1.bf16.msra.mxu0 %v846
    %917 = vmatprep.subr.bf16.mxu0 0
    %918 = vmatpush1.bf16.msra.mxu0 %v847
    %919 = vmatprep.subr.bf16.mxu0 0
    %920 = vmatpush1.bf16.msra.mxu0 %v848
    %921 = vmatprep.subr.bf16.mxu0 0
    %922 = vmatpush1.bf16.msra.mxu0 %v849
    %923 = vmatprep.subr.bf16.mxu0 0
    %924 = vmatpush1.bf16.msra.mxu0 %v850
    %925 = vmatprep.subr.bf16.mxu0 0
    %926 = vmatpush1.bf16.msra.mxu0 %v851
    %927 = vmatprep.subr.bf16.mxu0 0
    %928 = vmatpush1.bf16.msra.mxu0 %v852
    %929 = vmatprep.subr.bf16.mxu0 0
    %930 = vmatpush1.bf16.msra.mxu0 %v853
    %931 = vmatprep.subr.bf16.mxu0 0
    %932 = vmatpush1.bf16.msra.mxu0 %v854
    %933 = vmatprep.subr.bf16.mxu0 0
    %934 = vmatpush1.bf16.msra.mxu0 %v855
    %935 = vmatprep.subr.bf16.mxu0 0
    %936 = vmatpush1.bf16.msra.mxu0 %v856
    %937 = vmatprep.mubr.bf16.mxu0 %v700
    %938 = vmatmul.mubr.bf16.gmra.mrb[0].mxu0 %v699
    %v939 = vpop.f32.mrb[0].mxu0
    %v940 = vadd.f32 %v711, %v939
    %v941 = vpop.f32.mrb[0].mxu0
    %v942 = vpop.f32.mrb[0].mxu0
    %v943 = vadd.f32 %v711, %v942
    %v944 = vpop.f32.mrb[0].mxu0
    %945 = vmatprep.mubr.bf16.mxu0 %v704
    %946 = vmatmul.mubr.bf16.gmra.mrb[0].mxu0 %v703
    %v947 = vpop.f32.mrb[0].mxu0
    %v948 = vadd.f32 %v711, %v947
    %v949 = vpop.f32.mrb[0].mxu0
    %v950 = vpop.f32.mrb[0].mxu0
    %v951 = vadd.f32 %v711, %v950
    %v952 = vpop.f32.mrb[0].mxu0
    %953 = vdwg.mxu0
    %954 = vmatprep.subr.bf16.mxu0 0
    %955 = vmatpush1.bf16.msra.mxu0 %v857
    %956 = vmatprep.subr.bf16.mxu0 0
    %957 = vmatpush1.bf16.msra.mxu0 %v858
    %958 = vmatprep.subr.bf16.mxu0 0
    %959 = vmatpush1.bf16.msra.mxu0 %v859
    %960 = vmatprep.subr.bf16.mxu0 0
    %961 = vmatpush1.bf16.msra.mxu0 %v860
    %962 = vmatprep.subr.bf16.mxu0 0
    %963 = vmatpush1.bf16.msra.mxu0 %v861
    %964 = vmatprep.subr.bf16.mxu0 0
    %965 = vmatpush1.bf16.msra.mxu0 %v862
    %966 = vmatprep.subr.bf16.mxu0 0
    %967 = vmatpush1.bf16.msra.mxu0 %v863
    %968 = vmatprep.subr.bf16.mxu0 0
    %969 = vmatpush1.bf16.msra.mxu0 %v864
    %970 = vmatprep.subr.bf16.mxu0 0
    %971 = vmatpush1.bf16.msra.mxu0 %v865
    %972 = vmatprep.subr.bf16.mxu0 0
    %973 = vmatpush1.bf16.msra.mxu0 %v866
    %974 = vmatprep.subr.bf16.mxu0 0
    %975 = vmatpush1.bf16.msra.mxu0 %v867
    %976 = vmatprep.subr.bf16.mxu0 0
    %977 = vmatpush1.bf16.msra.mxu0 %v868
    %978 = vmatprep.subr.bf16.mxu0 0
    %979 = vmatpush1.bf16.msra.mxu0 %v869
    %980 = vmatprep.subr.bf16.mxu0 0
    %981 = vmatpush1.bf16.msra.mxu0 %v870
    %982 = vmatprep.subr.bf16.mxu0 0
    %983 = vmatpush1.bf16.msra.mxu0 %v871
    %984 = vmatprep.subr.bf16.mxu0 0
    %985 = vmatpush1.bf16.msra.mxu0 %v872
    %986 = vmatprep.mubr.bf16.mxu0 %v702
    %987 = vmatmul.mubr.bf16.gmra.mrb[0].mxu0 %v701
    %v988 = vpop.f32.mrb[0].mxu0
    %v989 = vadd.f32 %v940, %v988
    %v990 = vpop.f32.mrb[0].mxu0
    %v991 = vpop.f32.mrb[0].mxu0
    %v992 = vadd.f32 %v943, %v991
    %v993 = vpop.f32.mrb[0].mxu0
    %994 = vmatprep.mubr.bf16.mxu0 %v706
    %995 = vmatmul.mubr.bf16.gmra.mrb[0].mxu0 %v705
    %v996 = vpop.f32.mrb[0].mxu0
    %v997 = vadd.f32 %v948, %v996
    %v998 = vpop.f32.mrb[0].mxu0
    %v999 = vpop.f32.mrb[0].mxu0
    %v1000 = vadd.f32 %v951, %v999
    %v1001 = vpop.f32.mrb[0].mxu0
    %1002 = vdwg.mxu0
    %1003 = vst [vmem:[#allocation10] sm:$0xff] %v989
    %1004 = vst [vmem:[#allocation10 + $0x8] sm:$0xff] %v992
    %1005 = vst [vmem:[#allocation10 + $0x10] sm:$0xff] %v997
    %1006 = vst [vmem:[#allocation10 + $0x18] sm:$0xff] %v1000
    %1007 = vst [vmem:[#allocation11] sm:$0xff] %v197
    %1008 = vst [vmem:[#allocation11 + $0x8] sm:$0xff] %v198
    %1009 = vst [vmem:[#allocation11 + $0x10] sm:$0xff] %v199
    %1010 = vst [vmem:[#allocation11 + $0x18] sm:$0xff] %v200
    // Predicated region
    $region50: #{tpu_custom_call.1} parent=1 // pred_check
      _
    $region51: #{tpu_custom_call.1} parent=1 // pred_check_branch
      %1012 = sbr.rel (0) target = $region53
    $region52: #{tpu_custom_call.1} parent=1 // pred_region
      %s1014 = ssub.s32 512, 512
      %1015 = vsyncadd [#allocation4], %s1014
      %s1016 = sshll.u32 [#allocation10], 4
      %s1017 = int_to_ptr.vmem [resolvable:$true] %s1016
      %1022 = dma.vmem_to_hbm [thread:$0]  %s1017, 512, %s8, [#allocation4], 128, 128, 8
    $region53: #{tpu_custom_call.1} parent=1 // pred_fallthru
      _
    // Predicated region
    $region54: #{tpu_custom_call.1} parent=1 // pred_check
      _
    $region55: #{tpu_custom_call.1} parent=1 // pred_check_branch
      %1024 = sbr.rel (0) target = $region57
    $region56: #{tpu_custom_call.1} parent=1 // pred_region
      %s1026 = ssub.s32 512, 512
      %1027 = vsyncadd [#allocation12], %s1026
      %s1028 = sshll.u32 [#allocation11], 4
      %s1029 = int_to_ptr.vmem [resolvable:$true] %s1028
      %1034 = dma.vmem_to_hbm [thread:$0]  %s1029, 512, %s9, [#allocation12], 128, 128, 8
    $region57: #{tpu_custom_call.1} parent=1 // pred_fallthru
      _
    // Predicated region
    $region58: #{tpu_custom_call.1} parent=1 // pred_check
      _
    $region59: #{tpu_custom_call.1} parent=1 // pred_check_branch
      %1036 = sbr.rel (0) target = $region61
    $region60: #{tpu_custom_call.1} parent=1 // pred_region
      %1037 = dma.done [#allocation4], 512
    $region61: #{tpu_custom_call.1} parent=1 // pred_fallthru
      _
    // Predicated region
    $region62: #{tpu_custom_call.1} parent=1 // pred_check
      _
    $region63: #{tpu_custom_call.1} parent=1 // pred_check_branch
      %1039 = sbr.rel (0) target = $region65
    $region64: #{tpu_custom_call.1} parent=1 // pred_region
      %1040 = dma.done [#allocation12], 512
    $region65: #{tpu_custom_call.1} parent=1 // pred_fallthru
      _
    %1041 = vsyncpa [#allocation3], 1
    %1042 = vsyncpa [#allocation6], 1
    %1043 = vsyncpa [#allocation9], 1
    %1044 = vsyncpa [#allocation4], 1
    %1045 = vsyncpa [#allocation12], 1

</llo_original>
